<compile_context>
chip_gen: v5e
topology: v5e:2x2
jax: 0.10.0
libtpu: 0.0.40
codegen_flags: <defaults>
</compile_context>

<pallas_src>
import functools

import jax
import jax.numpy as jnp
from jax.experimental import pallas as pl
from jax.experimental.pallas import tpu as pltpu


def _pick_tile(total, align, target):
    """Largest divisor of `total` that is a multiple of `align` and <= target.

    Falls back to the full extent (always a legal block: equals the array dim).
    """
    best = None
    t = align
    limit = min(total, target)
    while t <= limit:
        if total % t == 0:
            best = t
        t += align
    return best if best is not None else total


def _bn_stats_kernel(gamma_ref, beta_ref, x_ref,
                     mean_ref, var_ref, scale_ref, shift_ref, *, inv_m, eps):
    # x_ref: (1, Ct, Mt) in native dtype.
    # mean_ref / var_ref / scale_ref / shift_ref: (1, Ct, 1) f32 output blocks,
    # resident across the (n, m) reduction grid axes (constant block index),
    # so mean/var double as f32 accumulators for sum / sum-of-squares.
    n_id = pl.program_id(1)
    m_id = pl.program_id(2)

    @pl.when(jnp.logical_and(n_id == 0, m_id == 0))
    def _init():
        mean_ref[...] = jnp.zeros_like(mean_ref)
        var_ref[...] = jnp.zeros_like(var_ref)
        scale_ref[...] = jnp.zeros_like(scale_ref)
        shift_ref[...] = jnp.zeros_like(shift_ref)

    xf = x_ref[...].astype(jnp.float32)  # widen per block for f32 accumulation
    mean_ref[...] += jnp.sum(xf, axis=(0, 2), keepdims=True)
    var_ref[...] += jnp.sum(xf * xf, axis=(0, 2), keepdims=True)

    @pl.when(jnp.logical_and(n_id == pl.num_programs(1) - 1,
                             m_id == pl.num_programs(2) - 1))
    def _finalize():
        mu = mean_ref[...] * inv_m
        var = jnp.maximum(var_ref[...] * inv_m - mu * mu, 0.0)  # biased variance
        inv_std = jax.lax.rsqrt(var + eps)                      # EUP slot
        scale = gamma_ref[...].astype(jnp.float32) * inv_std
        mean_ref[...] = mu
        var_ref[...] = var
        scale_ref[...] = scale
        shift_ref[...] = beta_ref[...].astype(jnp.float32) - mu * scale


def _bn_norm_kernel(scale_ref, shift_ref, x_ref, o_ref):
    # Pure streaming pass: one multiply-add per element of the block, with a
    # lane-dense (Mt >= 128) output tile so stores are unmasked vst.
    o_ref[...] = (x_ref[...] * scale_ref[...] + shift_ref[...]).astype(o_ref.dtype)


@functools.partial(jax.jit, static_argnames=("eps", "momentum"))
def batchnorm2d_forward(x, gamma, beta, running_mean, running_var,
                        eps=1e-5, momentum=0.1):
    """Training-mode BatchNorm2d forward (matches the module's grad-enabled branch).

    x:     (N, C, H, W)
    gamma: (1, C, 1, 1)
    beta:  (1, C, 1, 1)
    Returns (out, new_running_mean, new_running_var).
    """
    N, C, H, W = x.shape
    HW = H * W
    M = N * HW

    # Free (row-major) reshapes only — no transposes, no extra HBM traffic.
    x3 = x.reshape(N, C, HW)
    g3 = gamma.reshape(1, C, 1)
    b3 = beta.reshape(1, C, 1)

    Ct = _pick_tile(C, 8, 128)      # sublane-aligned channel tile (full C if C % 8 != 0)
    Mt = _pick_tile(HW, 128, 2048)  # lane-dense spatial tile (full HW if HW % 128 != 0)
    nc, nm = C // Ct, HW // Mt

    x_spec = pl.BlockSpec((1, Ct, Mt), lambda c, n, m: (n, c, m))
    stat_spec = pl.BlockSpec((1, Ct, 1), lambda c, n, m: (0, c, 0))
    stat_shape = jax.ShapeDtypeStruct((1, C, 1), jnp.float32)

    # ---- Pass 1: per-channel mean / biased variance + folded scale/shift
    #      (single streaming read of x).
    mean3, var3, scale3, shift3 = pl.pallas_call(
        functools.partial(_bn_stats_kernel, inv_m=1.0 / float(M), eps=float(eps)),
        grid=(nc, N, nm),
        in_specs=[stat_spec, stat_spec, x_spec],
        out_specs=(stat_spec, stat_spec, stat_spec, stat_spec),
        out_shape=(stat_shape, stat_shape, stat_shape, stat_shape),
        compiler_params=pltpu.CompilerParams(
            dimension_semantics=("parallel", "arbitrary", "arbitrary")),
    )(g3, b3, x3)

    # ---- Pass 2: normalize + affine (one streaming read + one streaming write,
    #      single FMA per element — all the per-channel math was done in pass 1).
    out3 = pl.pallas_call(
        _bn_norm_kernel,
        grid=(nc, N, nm),
        in_specs=[stat_spec, stat_spec, x_spec],
        out_specs=x_spec,
        out_shape=jax.ShapeDtypeStruct((N, C, HW), x.dtype),
        compiler_params=pltpu.CompilerParams(
            dimension_semantics=("parallel", "parallel", "parallel")),
    )(scale3, shift3, x3)

    out = out3.reshape(N, C, H, W)

    # Running-stat update: tiny (C,)-sized glue; matches the spec module's
    # training branch exactly (it uses the *biased* variance for both the
    # normalization and the running_var update).
    # TODO(synk): eval-mode branch (normalize with running stats) not emitted;
    # the spec's forward under autograd is the training branch implemented here.
    mu4 = mean3.reshape(1, C, 1, 1)
    var4 = var3.reshape(1, C, 1, 1)
    new_running_mean = momentum * mu4 + (1.0 - momentum) * running_mean
    new_running_var = momentum * var4 + (1.0 - momentum) * running_var
    return out, new_running_mean, new_running_var


def _reference(x, gamma, beta, eps):
    mu = jnp.mean(x, axis=(0, 2, 3), keepdims=True)
    var = jnp.var(x, axis=(0, 2, 3), keepdims=True)
    x_hat = (x - mu) / jnp.sqrt(var + eps)
    return gamma * x_hat + beta


def _check(key, N, C, H, W, eps=1e-5, momentum=0.1):
    x = jax.random.normal(key, (N, C, H, W), dtype=jnp.float32)
    gamma = jnp.ones((1, C, 1, 1), dtype=jnp.float32)
    beta = jnp.zeros((1, C, 1, 1), dtype=jnp.float32)
    running_mean = jnp.zeros((1, C, 1, 1), dtype=jnp.float32)
    running_var = jnp.ones((1, C, 1, 1), dtype=jnp.float32)

    out, new_rm, new_rv = batchnorm2d_forward(
        x, gamma, beta, running_mean, running_var, eps=eps, momentum=momentum)
    out = jax.block_until_ready(out)
    new_rm = jax.block_until_ready(new_rm)
    new_rv = jax.block_until_ready(new_rv)

    ref = _reference(x, gamma, beta, eps)
    assert out.shape == x.shape and out.dtype == x.dtype
    assert jnp.allclose(out, ref, atol=1e-5, rtol=1e-5), "output mismatch vs reference"

    ref_mu = jnp.mean(x, axis=(0, 2, 3), keepdims=True)
    ref_var = jnp.var(x, axis=(0, 2, 3), keepdims=True)
    assert jnp.allclose(new_rm, momentum * ref_mu + (1 - momentum) * running_mean,
                        atol=1e-5), "running_mean mismatch"
    assert jnp.allclose(new_rv, momentum * ref_var + (1 - momentum) * running_var,
                        atol=1e-5), "running_var mismatch"


if __name__ == "__main__":
    key = jax.random.PRNGKey(0)
    k0, k1, k2 = jax.random.split(key, 3)
    # Shape implied by the module (small): batch=2, channels=4, spatial=16.
    _check(k0, 2, 4, 16, 16)
    # Multi-channel-tile-friendly shape (Ct=16 sublane tile, single lane tile).
    _check(k1, 2, 16, 32, 32)
    # Exercises multi-tile spatial accumulation (HW=4096 -> Mt=2048, nm=2) plus
    # the batch reduction axis (N=2).
    _check(k2, 2, 8, 64, 64)
    print("KERNEL_OK")
</pallas_src>

<mosaic_0001>
module attributes {stable_mosaic.version = 11 : i64} {
  func.func @_bn_norm_kernel(%arg0: i32, %arg1: i32, %arg2: i32, %arg3: memref<1x4x1xf32, #tpu.memory_space<vmem>>, %arg4: memref<1x4x1xf32, #tpu.memory_space<vmem>>, %arg5: memref<1x4x256xf32, #tpu.memory_space<vmem>>, %arg6: memref<1x4x256xf32, #tpu.memory_space<vmem>>) attributes {dimension_semantics = [#tpu.dimension_semantics<parallel>, #tpu.dimension_semantics<parallel>, #tpu.dimension_semantics<parallel>], iteration_bounds = array<i64: 1, 2, 1>, scalar_prefetch = 0 : i64, scratch_operands = 0 : i64, tpu.core_type = #tpu.core_type<tc>, window_params = [{transform_indices = @transform_0, window_bounds = array<i64: 1, 4, 1>}, {transform_indices = @transform_1, window_bounds = array<i64: 1, 4, 1>}, {transform_indices = @transform_2, window_bounds = array<i64: 1, 4, 256>}, {transform_indices = @transform_3, window_bounds = array<i64: 1, 4, 256>}]} {
    %c0 = arith.constant 0 : index
    %c0_0 = arith.constant 0 : index
    %c0_1 = arith.constant 0 : index
    %0 = vector.load %arg5[%c0, %c0_0, %c0_1] : memref<1x4x256xf32, #tpu.memory_space<vmem>>, vector<1x4x256xf32>
    %c0_2 = arith.constant 0 : index
    %c0_3 = arith.constant 0 : index
    %c0_4 = arith.constant 0 : index
    %1 = vector.load %arg3[%c0_2, %c0_3, %c0_4] : memref<1x4x1xf32, #tpu.memory_space<vmem>>, vector<1x4x1xf32>
    %2 = vector.broadcast %1 : vector<1x4x1xf32> to vector<1x4x256xf32>
    %3 = arith.mulf %0, %2 : vector<1x4x256xf32>
    %c0_5 = arith.constant 0 : index
    %c0_6 = arith.constant 0 : index
    %c0_7 = arith.constant 0 : index
    %4 = vector.load %arg4[%c0_5, %c0_6, %c0_7] : memref<1x4x1xf32, #tpu.memory_space<vmem>>, vector<1x4x1xf32>
    %5 = vector.broadcast %4 : vector<1x4x1xf32> to vector<1x4x256xf32>
    %6 = arith.addf %3, %5 : vector<1x4x256xf32>
    %c0_8 = arith.constant 0 : index
    %c0_9 = arith.constant 0 : index
    %c0_10 = arith.constant 0 : index
    %7 = vector.load %arg6[%c0_8, %c0_9, %c0_10] : memref<1x4x256xf32, #tpu.memory_space<vmem>>, vector<1x4x256xf32>
    tpu.vector_store %arg6[%c0_8, %c0_9, %c0_10], %6 {strides = array<i32>} : memref<1x4x256xf32, #tpu.memory_space<vmem>>, vector<1x4x256xf32>,
    return
  }
  func.func @transform_0(%arg0: i32, %arg1: i32, %arg2: i32) -> (i32, i32, i32) {
    %c0_i32 = arith.constant 0 : i32
    %c0_i32_0 = arith.constant 0 : i32
    %c0_i32_1 = arith.constant 0 : i32
    return %c0_i32, %arg0, %c0_i32_0 : i32, i32, i32
  }
  func.func @transform_1(%arg0: i32, %arg1: i32, %arg2: i32) -> (i32, i32, i32) {
    %c0_i32 = arith.constant 0 : i32
    %c0_i32_0 = arith.constant 0 : i32
    %c0_i32_1 = arith.constant 0 : i32
    return %c0_i32, %arg0, %c0_i32_0 : i32, i32, i32
  }
  func.func @transform_2(%arg0: i32, %arg1: i32, %arg2: i32) -> (i32, i32, i32) {
    %c0_i32 = arith.constant 0 : i32
    return %arg1, %arg0, %arg2 : i32, i32, i32
  }
  func.func @transform_3(%arg0: i32, %arg1: i32, %arg2: i32) -> (i32, i32, i32) {
    %c0_i32 = arith.constant 0 : i32
    return %arg1, %arg0, %arg2 : i32, i32, i32
  }
}

module attributes {stable_mosaic.version = 11 : i64} {
  func.func @_bn_stats_kernel(%arg0: i32, %arg1: i32, %arg2: i32, %arg3: memref<1x4x1xf32, #tpu.memory_space<vmem>>, %arg4: memref<1x4x1xf32, #tpu.memory_space<vmem>>, %arg5: memref<1x4x256xf32, #tpu.memory_space<vmem>>, %arg6: memref<1x4x1xf32, #tpu.memory_space<vmem>>, %arg7: memref<1x4x1xf32, #tpu.memory_space<vmem>>, %arg8: memref<1x4x1xf32, #tpu.memory_space<vmem>>, %arg9: memref<1x4x1xf32, #tpu.memory_space<vmem>>) attributes {dimension_semantics = [#tpu.dimension_semantics<parallel>, #tpu.dimension_semantics<arbitrary>, #tpu.dimension_semantics<arbitrary>], iteration_bounds = array<i64: 1, 2, 1>, scalar_prefetch = 0 : i64, scratch_operands = 0 : i64, tpu.core_type = #tpu.core_type<tc>, window_params = [{transform_indices = @transform_0, window_bounds = array<i64: 1, 4, 1>}, {transform_indices = @transform_1, window_bounds = array<i64: 1, 4, 1>}, {transform_indices = @transform_2, window_bounds = array<i64: 1, 4, 256>}, {transform_indices = @transform_3, window_bounds = array<i64: 1, 4, 1>}, {transform_indices = @transform_4, window_bounds = array<i64: 1, 4, 1>}, {transform_indices = @transform_5, window_bounds = array<i64: 1, 4, 1>}, {transform_indices = @transform_6, window_bounds = array<i64: 1, 4, 1>}]} {
    %c0_i32 = arith.constant 0 : i32
    %0 = arith.cmpi eq, %arg1, %c0_i32 : i32
    %c0_i32_0 = arith.constant 0 : i32
    %1 = arith.cmpi eq, %arg2, %c0_i32_0 : i32
    %2 = arith.andi %0, %1 : i1
    %3 = arith.extui %2 : i1 to i32
    %c0_i32_1 = arith.constant 0 : i32
    %4 = arith.cmpi ne, %3, %c0_i32_1 : i32
    scf.if %4 {
      %cst_19 = arith.constant 0.000000e+00 : f32
      %22 = vector.broadcast %cst_19 : f32 to vector<1x4x1xf32>
      %c0_20 = arith.constant 0 : index
      %c0_21 = arith.constant 0 : index
      %c0_22 = arith.constant 0 : index
      %23 = vector.load %arg6[%c0_20, %c0_21, %c0_22] : memref<1x4x1xf32, #tpu.memory_space<vmem>>, vector<1x4x1xf32>
      tpu.vector_store %arg6[%c0_20, %c0_21, %c0_22], %22 {strides = array<i32>} : memref<1x4x1xf32, #tpu.memory_space<vmem>>, vector<1x4x1xf32>,
      %cst_23 = arith.constant 0.000000e+00 : f32
      %24 = vector.broadcast %cst_23 : f32 to vector<1x4x1xf32>
      %c0_24 = arith.constant 0 : index
      %c0_25 = arith.constant 0 : index
      %c0_26 = arith.constant 0 : index
      %25 = vector.load %arg7[%c0_24, %c0_25, %c0_26] : memref<1x4x1xf32, #tpu.memory_space<vmem>>, vector<1x4x1xf32>
      tpu.vector_store %arg7[%c0_24, %c0_25, %c0_26], %24 {strides = array<i32>} : memref<1x4x1xf32, #tpu.memory_space<vmem>>, vector<1x4x1xf32>,
      %cst_27 = arith.constant 0.000000e+00 : f32
      %26 = vector.broadcast %cst_27 : f32 to vector<1x4x1xf32>
      %c0_28 = arith.constant 0 : index
      %c0_29 = arith.constant 0 : index
      %c0_30 = arith.constant 0 : index
      %27 = vector.load %arg8[%c0_28, %c0_29, %c0_30] : memref<1x4x1xf32, #tpu.memory_space<vmem>>, vector<1x4x1xf32>
      tpu.vector_store %arg8[%c0_28, %c0_29, %c0_30], %26 {strides = array<i32>} : memref<1x4x1xf32, #tpu.memory_space<vmem>>, vector<1x4x1xf32>,
      %cst_31 = arith.constant 0.000000e+00 : f32
      %28 = vector.broadcast %cst_31 : f32 to vector<1x4x1xf32>
      %c0_32 = arith.constant 0 : index
      %c0_33 = arith.constant 0 : index
      %c0_34 = arith.constant 0 : index
      %29 = vector.load %arg9[%c0_32, %c0_33, %c0_34] : memref<1x4x1xf32, #tpu.memory_space<vmem>>, vector<1x4x1xf32>
      tpu.vector_store %arg9[%c0_32, %c0_33, %c0_34], %28 {strides = array<i32>} : memref<1x4x1xf32, #tpu.memory_space<vmem>>, vector<1x4x1xf32>,
    } else {
    }
    %c0 = arith.constant 0 : index
    %c0_2 = arith.constant 0 : index
    %c0_3 = arith.constant 0 : index
    %5 = vector.load %arg5[%c0, %c0_2, %c0_3] : memref<1x4x256xf32, #tpu.memory_space<vmem>>, vector<1x4x256xf32>
    %c0_4 = arith.constant 0 : index
    %c0_5 = arith.constant 0 : index
    %c0_6 = arith.constant 0 : index
    %6 = vector.load %arg6[%c0_4, %c0_5, %c0_6] : memref<1x4x1xf32, #tpu.memory_space<vmem>>, vector<1x4x1xf32>
    %cst = arith.constant dense<0.000000e+00> : vector<4xf32>
    %7 = vector.multi_reduction <add>, %5, %cst [0, 2] : vector<1x4x256xf32> to vector<4xf32>
    %8 = vector.shape_cast %7 : vector<4xf32> to vector<1x4x1xf32>
    %9 = arith.addf %6, %8 : vector<1x4x1xf32>
    %c0_7 = arith.constant 0 : index
    %c0_8 = arith.constant 0 : index
    %c0_9 = arith.constant 0 : index
    %10 = vector.load %arg6[%c0_7, %c0_8, %c0_9] : memref<1x4x1xf32, #tpu.memory_space<vmem>>, vector<1x4x1xf32>
    tpu.vector_store %arg6[%c0_7, %c0_8, %c0_9], %9 {strides = array<i32>} : memref<1x4x1xf32, #tpu.memory_space<vmem>>, vector<1x4x1xf32>,
    %c0_10 = arith.constant 0 : index
    %c0_11 = arith.constant 0 : index
    %c0_12 = arith.constant 0 : index
    %11 = vector.load %arg7[%c0_10, %c0_11, %c0_12] : memref<1x4x1xf32, #tpu.memory_space<vmem>>, vector<1x4x1xf32>
    %12 = arith.mulf %5, %5 : vector<1x4x256xf32>
    %cst_13 = arith.constant dense<0.000000e+00> : vector<4xf32>
    %13 = vector.multi_reduction <add>, %12, %cst_13 [0, 2] : vector<1x4x256xf32> to vector<4xf32>
    %14 = vector.shape_cast %13 : vector<4xf32> to vector<1x4x1xf32>
    %15 = arith.addf %11, %14 : vector<1x4x1xf32>
    %c0_14 = arith.constant 0 : index
    %c0_15 = arith.constant 0 : index
    %c0_16 = arith.constant 0 : index
    %16 = vector.load %arg7[%c0_14, %c0_15, %c0_16] : memref<1x4x1xf32, #tpu.memory_space<vmem>>, vector<1x4x1xf32>
    tpu.vector_store %arg7[%c0_14, %c0_15, %c0_16], %15 {strides = array<i32>} : memref<1x4x1xf32, #tpu.memory_space<vmem>>, vector<1x4x1xf32>,
    %c1_i32 = arith.constant 1 : i32
    %17 = arith.cmpi eq, %arg1, %c1_i32 : i32
    %c0_i32_17 = arith.constant 0 : i32
    %18 = arith.cmpi eq, %arg2, %c0_i32_17 : i32
    %19 = arith.andi %17, %18 : i1
    %20 = arith.extui %19 : i1 to i32
    %c0_i32_18 = arith.constant 0 : i32
    %21 = arith.cmpi ne, %20, %c0_i32_18 : i32
    scf.if %21 {
      %c0_19 = arith.constant 0 : index
      %c0_20 = arith.constant 0 : index
      %c0_21 = arith.constant 0 : index
      %22 = vector.load %arg6[%c0_19, %c0_20, %c0_21] : memref<1x4x1xf32, #tpu.memory_space<vmem>>, vector<1x4x1xf32>
      %cst_22 = arith.constant 0.001953125 : f32
      %23 = vector.broadcast %cst_22 : f32 to vector<1x4x1xf32>
      %24 = arith.mulf %22, %23 : vector<1x4x1xf32>
      %c0_23 = arith.constant 0 : index
      %c0_24 = arith.constant 0 : index
      %c0_25 = arith.constant 0 : index
      %25 = vector.load %arg7[%c0_23, %c0_24, %c0_25] : memref<1x4x1xf32, #tpu.memory_space<vmem>>, vector<1x4x1xf32>
      %cst_26 = arith.constant 0.001953125 : f32
      %26 = vector.broadcast %cst_26 : f32 to vector<1x4x1xf32>
      %27 = arith.mulf %25, %26 : vector<1x4x1xf32>
      %28 = arith.mulf %24, %24 : vector<1x4x1xf32>
      %29 = arith.subf %27, %28 : vector<1x4x1xf32>
      %cst_27 = arith.constant 0.000000e+00 : f32
      %30 = vector.broadcast %cst_27 : f32 to vector<1x4x1xf32>
      %31 = arith.maximumf %29, %30 : vector<1x4x1xf32>
      %cst_28 = arith.constant 9.99999974E-6 : f32
      %32 = vector.broadcast %cst_28 : f32 to vector<1x4x1xf32>
      %33 = arith.addf %31, %32 : vector<1x4x1xf32>
      %34 = math.rsqrt %33 : vector<1x4x1xf32>
      %c0_29 = arith.constant 0 : index
      %c0_30 = arith.constant 0 : index
      %c0_31 = arith.constant 0 : index
      %35 = vector.load %arg3[%c0_29, %c0_30, %c0_31] : memref<1x4x1xf32, #tpu.memory_space<vmem>>, vector<1x4x1xf32>
      %36 = arith.mulf %35, %34 : vector<1x4x1xf32>
      %c0_32 = arith.constant 0 : index
      %c0_33 = arith.constant 0 : index
      %c0_34 = arith.constant 0 : index
      %37 = vector.load %arg6[%c0_32, %c0_33, %c0_34] : memref<1x4x1xf32, #tpu.memory_space<vmem>>, vector<1x4x1xf32>
      tpu.vector_store %arg6[%c0_32, %c0_33, %c0_34], %24 {strides = array<i32>} : memref<1x4x1xf32, #tpu.memory_space<vmem>>, vector<1x4x1xf32>,
      %c0_35 = arith.constant 0 : index
      %c0_36 = arith.constant 0 : index
      %c0_37 = arith.constant 0 : index
      %38 = vector.load %arg7[%c0_35, %c0_36, %c0_37] : memref<1x4x1xf32, #tpu.memory_space<vmem>>, vector<1x4x1xf32>
      tpu.vector_store %arg7[%c0_35, %c0_36, %c0_37], %31 {strides = array<i32>} : memref<1x4x1xf32, #tpu.memory_space<vmem>>, vector<1x4x1xf32>,
      %c0_38 = arith.constant 0 : index
      %c0_39 = arith.constant 0 : index
      %c0_40 = arith.constant 0 : index
      %39 = vector.load %arg8[%c0_38, %c0_39, %c0_40] : memref<1x4x1xf32, #tpu.memory_space<vmem>>, vector<1x4x1xf32>
      tpu.vector_store %arg8[%c0_38, %c0_39, %c0_40], %36 {strides = array<i32>} : memref<1x4x1xf32, #tpu.memory_space<vmem>>, vector<1x4x1xf32>,
      %c0_41 = arith.constant 0 : index
      %c0_42 = arith.constant 0 : index
      %c0_43 = arith.constant 0 : index
      %40 = vector.load %arg4[%c0_41, %c0_42, %c0_43] : memref<1x4x1xf32, #tpu.memory_space<vmem>>, vector<1x4x1xf32>
      %41 = arith.mulf %24, %36 : vector<1x4x1xf32>
      %42 = arith.subf %40, %41 : vector<1x4x1xf32>
      %c0_44 = arith.constant 0 : index
      %c0_45 = arith.constant 0 : index
      %c0_46 = arith.constant 0 : index
      %43 = vector.load %arg9[%c0_44, %c0_45, %c0_46] : memref<1x4x1xf32, #tpu.memory_space<vmem>>, vector<1x4x1xf32>
      tpu.vector_store %arg9[%c0_44, %c0_45, %c0_46], %42 {strides = array<i32>} : memref<1x4x1xf32, #tpu.memory_space<vmem>>, vector<1x4x1xf32>,
    } else {
    }
    return
  }
  func.func @transform_0(%arg0: i32, %arg1: i32, %arg2: i32) -> (i32, i32, i32) {
    %c0_i32 = arith.constant 0 : i32
    %c0_i32_0 = arith.constant 0 : i32
    %c0_i32_1 = arith.constant 0 : i32
    return %c0_i32, %arg0, %c0_i32_0 : i32, i32, i32
  }
  func.func @transform_1(%arg0: i32, %arg1: i32, %arg2: i32) -> (i32, i32, i32) {
    %c0_i32 = arith.constant 0 : i32
    %c0_i32_0 = arith.constant 0 : i32
    %c0_i32_1 = arith.constant 0 : i32
    return %c0_i32, %arg0, %c0_i32_0 : i32, i32, i32
  }
  func.func @transform_2(%arg0: i32, %arg1: i32, %arg2: i32) -> (i32, i32, i32) {
    %c0_i32 = arith.constant 0 : i32
    return %arg1, %arg0, %arg2 : i32, i32, i32
  }
  func.func @transform_3(%arg0: i32, %arg1: i32, %arg2: i32) -> (i32, i32, i32) {
    %c0_i32 = arith.constant 0 : i32
    %c0_i32_0 = arith.constant 0 : i32
    %c0_i32_1 = arith.constant 0 : i32
    return %c0_i32, %arg0, %c0_i32_0 : i32, i32, i32
  }
  func.func @transform_4(%arg0: i32, %arg1: i32, %arg2: i32) -> (i32, i32, i32) {
    %c0_i32 = arith.constant 0 : i32
    %c0_i32_0 = arith.constant 0 : i32
    %c0_i32_1 = arith.constant 0 : i32
    return %c0_i32, %arg0, %c0_i32_0 : i32, i32, i32
  }
  func.func @transform_5(%arg0: i32, %arg1: i32, %arg2: i32) -> (i32, i32, i32) {
    %c0_i32 = arith.constant 0 : i32
    %c0_i32_0 = arith.constant 0 : i32
    %c0_i32_1 = arith.constant 0 : i32
    return %c0_i32, %arg0, %c0_i32_0 : i32, i32, i32
  }
  func.func @transform_6(%arg0: i32, %arg1: i32, %arg2: i32) -> (i32, i32, i32) {
    %c0_i32 = arith.constant 0 : i32
    %c0_i32_0 = arith.constant 0 : i32
    %c0_i32_1 = arith.constant 0 : i32
    return %c0_i32, %arg0, %c0_i32_0 : i32, i32, i32
  }
}

</mosaic_0001>

<llo_original>
// kernel: batchnorm2d_forward.3
$region0: #{batchnorm2d_forward.3}
  #allocation0 [shape = 'u32[]', space=smem, size = 0x4, offset = 0x4, fixed_abs, tag = 'smem constant byte address 0x4 - core index']
  #allocation1 [shape = 'u32[72,128]{1,0:T(1,128)}', space=vmem, size = 0x9000, scoped, tag = 'internal scratch']
  %s0 = inlined_call_operand.vmem [shape: f32[1,4,1], index: 0, kind: input, shape index: {}]
  %s1 = inlined_call_operand.vmem [shape: f32[1,4,1], index: 1, kind: input, shape index: {}]
  %s2 = inlined_call_operand.vmem [shape: f32[2,4,256], index: 2, kind: input, shape index: {}]
  %s3 = inlined_call_operand.vmem [shape: f32[2,4,256], index: 3, kind: output, shape index: {}]
  %s4 = sld [smem:[#allocation0]]
  $region45: #{batchnorm2d_forward.3} parent=0
    _
  %s6 = ssub.s32 1, %s4
  %s7 = scalar_select 0, %s6, %s4
  loop: start=0, step=1, limit=4
  $region2: #{batchnorm2d_forward.3} parent=0 // loop_pre_header
    _
  $region3: #{batchnorm2d_forward.3} parent=0 // loop_header
    %s9 = sphi 0, %s13
    %p10 = scmp.ge.s32.totalorder %s9, 4
    %s16 = sphi 0, %s35
    %s17 = sphi 0, %s31
    %s18 = sphi 0, %s27
    %s19 = sphi 0, %s16
    %s20 = sphi 0, %s17
    %s21 = sphi 0, %s18
    %s22 = sphi 0, %s19
    %s23 = sphi 0, %s20
    %s24 = sphi 0, %s21
    %s38 = sphi 0, %s40
    %s41 = sphi 0, %s38
    %s42 = sphi 0, %s41
    %s58 = sphi 0, %s42
    %s64 = sphi 0, %s66
    %s67 = sphi 0, %s64
    %s68 = sphi 0, %s67
    %s84 = sphi 0, %s68
    %s94 = sphi 0, %s96
    %s97 = sphi 0, %s94
    %s98 = sphi 0, %s97
    %s114 = sphi 0, %s98
    %s124 = sphi 0, %s126
    %s127 = sphi 0, %s124
    %s128 = sphi 0, %s127
    %s144 = sphi 0, %s128
  $region4: #{batchnorm2d_forward.3} parent=0 // loop_header_branch
    %12 = sbr.rel (%p10) target = $region8
  $region5: #{batchnorm2d_forward.3} parent=0 // loop_body
    %s14 = ssub.s32 %s9, 1
    %s15 = ssub.s32 %s9, 2
    %s25 = sadd.s32 1, %s18
    %p26 = scmp.ge.s32.totalorder %s25, 1
    %s27 = scalar_select %p26, 0, %s25
    %s28 = sadd.s32 1, %s17
    %s29 = scalar_select %p26, %s28, %s17
    %p30 = scmp.ge.s32.totalorder %s29, 2
    %s31 = scalar_select %p30, 0, %s29
    %s32 = sadd.s32 1, %s16
    %s33 = scalar_select %p30, %s32, %s16
    %p34 = scmp.ge.s32.totalorder %s33, 1
    %s35 = scalar_select %p34, 0, %s33
    %s36 = ssub.s32 %s16, %s35
    %p37 = scmp.eq.s32.totalorder %s36, 0
    %s39 = sadd.s32 %s38, 1
    %s40 = scalar_select %p37, %s38, %s39
    %p43 = pneg %p37
    %p44 = scmp.eq.s32.totalorder %s9, 1
    %p45 = por %p43, %p44
    %p46 = scmp.ne.s32.totalorder %s38, %s41
    %p47 = scmp.eq.s32.totalorder %s9, 0
    %p48 = por %p46, %p47
    %p49 = scmp.ne.s32.totalorder %s38, %s41
    %p50 = scmp.eq.s32.totalorder %s14, 1
    %p51 = por %p49, %p50
    %p52 = scmp.ne.s32.totalorder %s41, %s42
    %p53 = scmp.eq.s32.totalorder %s14, 0
    %p54 = por %p52, %p53
    %p55 = scmp.ne.s32.totalorder %s41, %s42
    %p56 = scmp.eq.s32.totalorder %s15, 1
    %p57 = por %p55, %p56
    %p59 = scmp.ne.s32.totalorder %s42, %s58
    %p60 = scmp.eq.s32.totalorder %s15, 0
    %p61 = por %p59, %p60
    %s62 = ssub.s32 %s16, %s35
    %p63 = scmp.eq.s32.totalorder %s62, 0
    %s65 = sadd.s32 %s64, 1
    %s66 = scalar_select %p63, %s64, %s65
    %p69 = pneg %p63
    %p70 = scmp.eq.s32.totalorder %s9, 1
    %p71 = por %p69, %p70
    %p72 = scmp.ne.s32.totalorder %s64, %s67
    %p73 = scmp.eq.s32.totalorder %s9, 0
    %p74 = por %p72, %p73
    %p75 = scmp.ne.s32.totalorder %s64, %s67
    %p76 = scmp.eq.s32.totalorder %s14, 1
    %p77 = por %p75, %p76
    %p78 = scmp.ne.s32.totalorder %s67, %s68
    %p79 = scmp.eq.s32.totalorder %s14, 0
    %p80 = por %p78, %p79
    %p81 = scmp.ne.s32.totalorder %s67, %s68
    %p82 = scmp.eq.s32.totalorder %s15, 1
    %p83 = por %p81, %p82
    %p85 = scmp.ne.s32.totalorder %s68, %s84
    %p86 = scmp.eq.s32.totalorder %s15, 0
    %p87 = por %p85, %p86
    %s88 = ssub.s32 %s17, %s31
    %s89 = ssub.s32 %s16, %s35
    %s90 = sor.u32 %s88, %s89
    %s91 = ssub.s32 %s18, %s27
    %s92 = sor.u32 %s90, %s91
    %p93 = scmp.eq.s32.totalorder %s92, 0
    %s95 = sadd.s32 %s94, 1
    %s96 = scalar_select %p93, %s94, %s95
    %p99 = pneg %p93
    %p100 = scmp.eq.s32.totalorder %s9, 1
    %p101 = por %p99, %p100
    %p102 = scmp.ne.s32.totalorder %s94, %s97
    %p103 = scmp.eq.s32.totalorder %s9, 0
    %p104 = por %p102, %p103
    %p105 = scmp.ne.s32.totalorder %s94, %s97
    %p106 = scmp.eq.s32.totalorder %s14, 1
    %p107 = por %p105, %p106
    %p108 = scmp.ne.s32.totalorder %s97, %s98
    %p109 = scmp.eq.s32.totalorder %s14, 0
    %p110 = por %p108, %p109
    %p111 = scmp.ne.s32.totalorder %s97, %s98
    %p112 = scmp.eq.s32.totalorder %s15, 1
    %p113 = por %p111, %p112
    %p115 = scmp.ne.s32.totalorder %s98, %s114
    %p116 = scmp.eq.s32.totalorder %s15, 0
    %p117 = por %p115, %p116
    %s118 = ssub.s32 %s17, %s31
    %s119 = ssub.s32 %s16, %s35
    %s120 = sor.u32 %s118, %s119
    %s121 = ssub.s32 %s18, %s27
    %s122 = sor.u32 %s120, %s121
    %p123 = scmp.eq.s32.totalorder %s122, 0
    %s125 = sadd.s32 %s124, 1
    %s126 = scalar_select %p123, %s124, %s125
    %p129 = pneg %p123
    %p130 = scmp.eq.s32.totalorder %s9, 1
    %p131 = por %p129, %p130
    %p132 = scmp.ne.s32.totalorder %s124, %s127
    %p133 = scmp.eq.s32.totalorder %s9, 0
    %p134 = por %p132, %p133
    %p135 = scmp.ne.s32.totalorder %s124, %s127
    %p136 = scmp.eq.s32.totalorder %s14, 1
    %p137 = por %p135, %p136
    %p138 = scmp.ne.s32.totalorder %s127, %s128
    %p139 = scmp.eq.s32.totalorder %s14, 0
    %p140 = por %p138, %p139
    %p141 = scmp.ne.s32.totalorder %s127, %s128
    %p142 = scmp.eq.s32.totalorder %s15, 1
    %p143 = por %p141, %p142
    %p145 = scmp.ne.s32.totalorder %s128, %s144
    %p146 = scmp.eq.s32.totalorder %s15, 0
    %p147 = por %p145, %p146
    %p148 = scmp.le.s32.totalorder 1, %s9
    %p149 = scmp.lt.s32.totalorder %s9, 3
    %p150 = pnand %p148, %p149
    %p151 = pneg %p150
    // Predicated region
    $region9: #{batchnorm2d_forward.3} parent=5 // pred_check
      _
    $region10: #{batchnorm2d_forward.3} parent=5 // pred_check_branch
      %153 = sbr.rel (%p150) target = $region12
    $region11: #{batchnorm2d_forward.3} parent=5 // pred_region
      %s154 = ssub.s32 %s9, 1
      // Predicated region
      $region13: #{batchnorm2d_forward.3} parent=11 // pred_check
        %p155 = pneg %p54
      $region14: #{batchnorm2d_forward.3} parent=11 // pred_check_branch
        %157 = sbr.rel (%p155) target = $region16
      $region15: #{batchnorm2d_forward.3} parent=11 // pred_region
        %p158 = scmp.lt.s32.totalorder %s19, 0
        %s159 = scalar_select %p158, %s19, 0
        %s160 = smul.addr %s159, 4
        %s161 = scalar_lea.vmem %s0, %s160
      $region16: #{batchnorm2d_forward.3} parent=11 // pred_fallthru
        _
      // Predicated region
      $region17: #{batchnorm2d_forward.3} parent=11 // pred_check
        %p162 = pneg %p80
      $region18: #{batchnorm2d_forward.3} parent=11 // pred_check_branch
        %164 = sbr.rel (%p162) target = $region20
      $region19: #{batchnorm2d_forward.3} parent=11 // pred_region
        %p165 = scmp.lt.s32.totalorder %s19, 0
        %s166 = scalar_select %p165, %s19, 0
        %s167 = smul.addr %s166, 4
        %s168 = scalar_lea.vmem %s1, %s167
      $region20: #{batchnorm2d_forward.3} parent=11 // pred_fallthru
        _
    $region12: #{batchnorm2d_forward.3} parent=5 // pred_fallthru
      _
    %p169 = scmp.lt.s32.totalorder %s9, 2
    // Predicated region
    $region21: #{batchnorm2d_forward.3} parent=5 // pred_check
      %p170 = pneg %p169
    $region22: #{batchnorm2d_forward.3} parent=5 // pred_check_branch
      %172 = sbr.rel (%p170) target = $region24
    $region23: #{batchnorm2d_forward.3} parent=5 // pred_region
      // Predicated region
      $region25: #{batchnorm2d_forward.3} parent=23 // pred_check
        %p173 = pneg %p104
      $region26: #{batchnorm2d_forward.3} parent=23 // pred_check_branch
        %175 = sbr.rel (%p173) target = $region28
      $region27: #{batchnorm2d_forward.3} parent=23 // pred_region
        %s176 = smul.u32 2, %s18
        %p177 = scmp.lt.s32.totalorder %s17, 1
        %s178 = scalar_select %p177, %s17, 1
        %p179 = scmp.lt.s32.totalorder %s16, 0
        %s180 = scalar_select %p179, %s16, 0
        %p181 = scmp.lt.s32.totalorder %s176, 1
        %s182 = scalar_select %p181, %s176, 1
        %s183 = smul.addr %s180, 2
        %s184 = sadd.s32 %s182, %s183
        %s185 = smul.addr %s178, 2
        %s186 = sadd.s32 %s184, %s185
        %s187 = smul.addr %s186, 4
        %s188 = scalar_lea.vmem %s2, %s187
        %s189 = smul.u32 2, %s18
      $region28: #{batchnorm2d_forward.3} parent=23 // pred_fallthru
        _
    $region24: #{batchnorm2d_forward.3} parent=5 // pred_fallthru
      _
    %p190 = scmp.le.s32.totalorder 1, %s9
    %p191 = scmp.lt.s32.totalorder %s9, 3
    %p192 = pnand %p190, %p191
    %p193 = pneg %p192
    // Predicated region
    $region29: #{batchnorm2d_forward.3} parent=5 // pred_check
      _
    $region30: #{batchnorm2d_forward.3} parent=5 // pred_check_branch
      %195 = sbr.rel (%p192) target = $region32
    $region31: #{batchnorm2d_forward.3} parent=5 // pred_region
      %s196 = ssub.s32 %s9, 1
      %p197 = scmp.lt.s32.totalorder %s19, 0
      %s198 = scalar_select %p197, %s19, 0
      %s199 = smul.addr %s198, 4
      %s200 = scalar_lea.vmem %s0, %s199
      %p201 = pneg %p54
      %p202 = pneg %p51
      %p203 = scmp.lt.s32.totalorder %s19, 0
      %s204 = scalar_select %p203, %s19, 0
      %s205 = smul.addr %s204, 4
      %s206 = scalar_lea.vmem %s1, %s205
      %p207 = pneg %p80
      %p208 = pneg %p77
      %s209 = smul.u32 2, %s21
      %p210 = scmp.lt.s32.totalorder %s20, 1
      %s211 = scalar_select %p210, %s20, 1
      %p212 = scmp.lt.s32.totalorder %s19, 0
      %s213 = scalar_select %p212, %s19, 0
      %p214 = scmp.lt.s32.totalorder %s209, 1
      %s215 = scalar_select %p214, %s209, 1
      %s216 = smul.addr %s213, 2
      %s217 = sadd.s32 %s215, %s216
      %s218 = smul.addr %s211, 2
      %s219 = sadd.s32 %s217, %s218
      %s220 = smul.addr %s219, 4
      %s221 = scalar_lea.vmem %s2, %s220
      %p222 = pneg %p110
      %p223 = pneg %p107
      %p224 = pneg %p140
      %p225 = pneg %p137
      %s226 = smul.u32 2, %s21
      %p227 = scmp.lt.s32.totalorder %s20, 1
      %s228 = scalar_select %p227, %s20, 1
      %p229 = scmp.lt.s32.totalorder %s19, 0
      %s230 = scalar_select %p229, %s19, 0
      %p231 = scmp.lt.s32.totalorder %s226, 1
      %s232 = scalar_select %p231, %s226, 1
      %s233 = smul.addr %s230, 2
      %s234 = sadd.s32 %s232, %s233
      %s235 = smul.addr %s228, 2
      %s236 = sadd.s32 %s234, %s235
      %s237 = smul.addr %s236, 4
      %s238 = scalar_lea.vmem %s3, %s237
      %p239 = scmp.lt.s32.totalorder %s19, 0
      %s240 = scalar_select %p239, %s19, 0
      %s241 = smul.addr %s240, 4
      %s242 = scalar_lea.vmem %s0, %s241
      %p243 = scmp.lt.s32.totalorder %s19, 0
      %s244 = scalar_select %p243, %s19, 0
      %s245 = smul.addr %s244, 4
      %s246 = scalar_lea.vmem %s1, %s245
      %s247 = smul.u32 2, %s21
      %p248 = scmp.lt.s32.totalorder %s20, 1
      %s249 = scalar_select %p248, %s20, 1
      %p250 = scmp.lt.s32.totalorder %s19, 0
      %s251 = scalar_select %p250, %s19, 0
      %p252 = scmp.lt.s32.totalorder %s247, 1
      %s253 = scalar_select %p252, %s247, 1
      %s254 = smul.addr %s251, 2
      %s255 = sadd.s32 %s253, %s254
      %s256 = smul.addr %s249, 2
      %s257 = sadd.s32 %s255, %s256
      %s258 = smul.addr %s257, 4
      %s259 = scalar_lea.vmem %s2, %s258
      %s260 = smul.u32 2, %s21
      %s261 = smul.u32 2, %s21
      %p262 = scmp.lt.s32.totalorder %s20, 1
      %s263 = scalar_select %p262, %s20, 1
      %p264 = scmp.lt.s32.totalorder %s19, 0
      %s265 = scalar_select %p264, %s19, 0
      %p266 = scmp.lt.s32.totalorder %s261, 1
      %s267 = scalar_select %p266, %s261, 1
      %s268 = smul.addr %s265, 2
      %s269 = sadd.s32 %s267, %s268
      %s270 = smul.addr %s263, 2
      %s271 = sadd.s32 %s269, %s270
      %s272 = smul.addr %s271, 4
      %s273 = scalar_lea.vmem %s3, %s272
      %s274 = smul.u32 2, %s21
      %v275 = vld [vmem:[%s259] sm:$0xff]
      %v276 = vld [vmem:[%s242] sm:$0xf]
      %278 = vset.pattern.permute.xlu0 0
      %279 = vperm.xlu0 %278, %v276
      %v280 = vpop.permute.xlu0 %279
      %v282 = vunpack.c.l.s4 839922192
      %v283 = vunpack.c.0.s8 %v282
      %v284 = vperm.slane %v280, %v283
      %v286 = vmul.f32 %v275, %v284
      %v287 = vld [vmem:[%s246] sm:$0xf]
      %289 = vset.pattern.permute.xlu0 0
      %290 = vperm.xlu0 %289, %v287
      %v291 = vpop.permute.xlu0 %290
      %v293 = vunpack.c.l.s4 839922192
      %v294 = vunpack.c.0.s8 %v293
      %v295 = vperm.slane %v291, %v294
      %v297 = vadd.f32 %v286, %v295
      %298 = vst [vmem:[%s273] sm:$0xff] %v297
      %s299 = smul.u32 2, %s21
      %p300 = scmp.lt.s32.totalorder %s20, 1
      %s301 = scalar_select %p300, %s20, 1
      %p302 = scmp.lt.s32.totalorder %s19, 0
      %s303 = scalar_select %p302, %s19, 0
      %p304 = scmp.lt.s32.totalorder %s299, 1
      %s305 = scalar_select %p304, %s299, 1
      %s306 = smul.addr %s303, 2
      %s307 = sadd.s32 %s305, %s306
      %s308 = smul.addr %s301, 2
      %s309 = sadd.s32 %s307, %s308
      %s310 = smul.addr %s309, 4
      %s311 = scalar_lea.vmem %s3, %s310
      // Predicated region
      $region33: #{batchnorm2d_forward.3} parent=31 // pred_check
        %p312 = pneg %p137
      $region34: #{batchnorm2d_forward.3} parent=31 // pred_check_branch
        %314 = sbr.rel (%p312) target = $region36
      $region35: #{batchnorm2d_forward.3} parent=31 // pred_region
        %s315 = smul.u32 2, %s21
      $region36: #{batchnorm2d_forward.3} parent=31 // pred_fallthru
        _
    $region32: #{batchnorm2d_forward.3} parent=5 // pred_fallthru
      _
    %p316 = scmp.le.s32.totalorder 2, %s9
    // Predicated region
    $region37: #{batchnorm2d_forward.3} parent=5 // pred_check
      %p317 = pneg %p316
    $region38: #{batchnorm2d_forward.3} parent=5 // pred_check_branch
      %319 = sbr.rel (%p317) target = $region40
    $region39: #{batchnorm2d_forward.3} parent=5 // pred_region
      %s320 = ssub.s32 %s9, 2
      // Predicated region
      $region41: #{batchnorm2d_forward.3} parent=39 // pred_check
        %p321 = pneg %p143
      $region42: #{batchnorm2d_forward.3} parent=39 // pred_check_branch
        %323 = sbr.rel (%p321) target = $region44
      $region43: #{batchnorm2d_forward.3} parent=39 // pred_region
        %s324 = smul.u32 2, %s24
        %p325 = scmp.lt.s32.totalorder %s23, 1
        %s326 = scalar_select %p325, %s23, 1
        %p327 = scmp.lt.s32.totalorder %s22, 0
        %s328 = scalar_select %p327, %s22, 0
        %p329 = scmp.lt.s32.totalorder %s324, 1
        %s330 = scalar_select %p329, %s324, 1
        %s331 = smul.addr %s328, 2
        %s332 = sadd.s32 %s330, %s331
        %s333 = smul.addr %s326, 2
        %s334 = sadd.s32 %s332, %s333
        %s335 = smul.addr %s334, 4
        %s336 = scalar_lea.vmem %s3, %s335
      $region44: #{batchnorm2d_forward.3} parent=39 // pred_fallthru
        _
    $region40: #{batchnorm2d_forward.3} parent=5 // pred_fallthru
      _
  $region6: #{batchnorm2d_forward.3} parent=0 // loop_footer
    %s13 = sadd.s32 1, %s9
  $region7: #{batchnorm2d_forward.3} parent=0 // loop_footer_branch
    %8 = sbr.rel target = $region3
  $region8: #{batchnorm2d_forward.3} parent=0 // loop_exit
    _

// kernel: batchnorm2d_forward.2
$region0: #{batchnorm2d_forward.2}
  #allocation0 [shape = 'u32[]', space=smem, size = 0x4, offset = 0x4, fixed_abs, tag = 'smem constant byte address 0x4 - core index']
  #allocation1 [shape = 'u32[72,128]{1,0:T(1,128)}', space=vmem, size = 0x9000, scoped, tag = 'internal scratch']
  %s0 = inlined_call_operand.vmem [shape: f32[1,4,1], index: 0, kind: input, shape index: {}]
  %s1 = inlined_call_operand.vmem [shape: f32[1,4,1], index: 1, kind: input, shape index: {}]
  %s2 = inlined_call_operand.vmem [shape: f32[2,4,256], index: 2, kind: input, shape index: {}]
  %s3 = inlined_call_operand.vmem [shape: f32[1,4,1], index: 3, kind: output, shape index: {0}]
  %s4 = inlined_call_operand.vmem [shape: f32[1,4,1], index: 4, kind: output, shape index: {1}]
  %s5 = inlined_call_operand.vmem [shape: f32[1,4,1], index: 5, kind: output, shape index: {2}]
  %s6 = inlined_call_operand.vmem [shape: f32[1,4,1], index: 6, kind: output, shape index: {3}]
  %7 = xla_tuple %s3, %s4, %s5, %s6
  %s8 = sld [smem:[#allocation0]]
  $region77: #{batchnorm2d_forward.2} parent=0
    _
  %s10 = ssub.s32 1, %s8
  %s11 = scalar_select 0, %s10, %s8
  loop: start=0, step=1, limit=4
  $region2: #{batchnorm2d_forward.2} parent=0 // loop_pre_header
    _
  $region3: #{batchnorm2d_forward.2} parent=0 // loop_header
    %s13 = sphi 0, %s17
    %p14 = scmp.ge.s32.totalorder %s13, 4
    %s20 = sphi 0, %s39
    %s21 = sphi 0, %s35
    %s22 = sphi 0, %s31
    %s23 = sphi 0, %s20
    %s24 = sphi 0, %s21
    %s25 = sphi 0, %s22
    %s26 = sphi 0, %s23
    %s27 = sphi 0, %s24
    %s28 = sphi 0, %s25
    %s42 = sphi 0, %s44
    %s45 = sphi 0, %s42
    %s46 = sphi 0, %s45
    %s62 = sphi 0, %s46
    %s68 = sphi 0, %s70
    %s71 = sphi 0, %s68
    %s72 = sphi 0, %s71
    %s88 = sphi 0, %s72
    %s98 = sphi 0, %s100
    %s101 = sphi 0, %s98
    %s102 = sphi 0, %s101
    %s118 = sphi 0, %s102
    %s124 = sphi 0, %s126
    %s127 = sphi 0, %s124
    %s128 = sphi 0, %s127
    %s144 = sphi 0, %s128
    %s150 = sphi 0, %s152
    %s153 = sphi 0, %s150
    %s154 = sphi 0, %s153
    %s170 = sphi 0, %s154
    %s176 = sphi 0, %s178
    %s179 = sphi 0, %s176
    %s180 = sphi 0, %s179
    %s196 = sphi 0, %s180
    %s202 = sphi 0, %s204
    %s205 = sphi 0, %s202
    %s206 = sphi 0, %s205
    %s222 = sphi 0, %s206
  $region4: #{batchnorm2d_forward.2} parent=0 // loop_header_branch
    %16 = sbr.rel (%p14) target = $region8
  $region5: #{batchnorm2d_forward.2} parent=0 // loop_body
    %s18 = ssub.s32 %s13, 1
    %s19 = ssub.s32 %s13, 2
    %s29 = sadd.s32 1, %s22
    %p30 = scmp.ge.s32.totalorder %s29, 1
    %s31 = scalar_select %p30, 0, %s29
    %s32 = sadd.s32 1, %s21
    %s33 = scalar_select %p30, %s32, %s21
    %p34 = scmp.ge.s32.totalorder %s33, 2
    %s35 = scalar_select %p34, 0, %s33
    %s36 = sadd.s32 1, %s20
    %s37 = scalar_select %p34, %s36, %s20
    %p38 = scmp.ge.s32.totalorder %s37, 1
    %s39 = scalar_select %p38, 0, %s37
    %s40 = ssub.s32 %s20, %s39
    %p41 = scmp.eq.s32.totalorder %s40, 0
    %s43 = sadd.s32 %s42, 1
    %s44 = scalar_select %p41, %s42, %s43
    %p47 = pneg %p41
    %p48 = scmp.eq.s32.totalorder %s13, 1
    %p49 = por %p47, %p48
    %p50 = scmp.ne.s32.totalorder %s42, %s45
    %p51 = scmp.eq.s32.totalorder %s13, 0
    %p52 = por %p50, %p51
    %p53 = scmp.ne.s32.totalorder %s42, %s45
    %p54 = scmp.eq.s32.totalorder %s18, 1
    %p55 = por %p53, %p54
    %p56 = scmp.ne.s32.totalorder %s45, %s46
    %p57 = scmp.eq.s32.totalorder %s18, 0
    %p58 = por %p56, %p57
    %p59 = scmp.ne.s32.totalorder %s45, %s46
    %p60 = scmp.eq.s32.totalorder %s19, 1
    %p61 = por %p59, %p60
    %p63 = scmp.ne.s32.totalorder %s46, %s62
    %p64 = scmp.eq.s32.totalorder %s19, 0
    %p65 = por %p63, %p64
    %s66 = ssub.s32 %s20, %s39
    %p67 = scmp.eq.s32.totalorder %s66, 0
    %s69 = sadd.s32 %s68, 1
    %s70 = scalar_select %p67, %s68, %s69
    %p73 = pneg %p67
    %p74 = scmp.eq.s32.totalorder %s13, 1
    %p75 = por %p73, %p74
    %p76 = scmp.ne.s32.totalorder %s68, %s71
    %p77 = scmp.eq.s32.totalorder %s13, 0
    %p78 = por %p76, %p77
    %p79 = scmp.ne.s32.totalorder %s68, %s71
    %p80 = scmp.eq.s32.totalorder %s18, 1
    %p81 = por %p79, %p80
    %p82 = scmp.ne.s32.totalorder %s71, %s72
    %p83 = scmp.eq.s32.totalorder %s18, 0
    %p84 = por %p82, %p83
    %p85 = scmp.ne.s32.totalorder %s71, %s72
    %p86 = scmp.eq.s32.totalorder %s19, 1
    %p87 = por %p85, %p86
    %p89 = scmp.ne.s32.totalorder %s72, %s88
    %p90 = scmp.eq.s32.totalorder %s19, 0
    %p91 = por %p89, %p90
    %s92 = ssub.s32 %s21, %s35
    %s93 = ssub.s32 %s20, %s39
    %s94 = sor.u32 %s92, %s93
    %s95 = ssub.s32 %s22, %s31
    %s96 = sor.u32 %s94, %s95
    %p97 = scmp.eq.s32.totalorder %s96, 0
    %s99 = sadd.s32 %s98, 1
    %s100 = scalar_select %p97, %s98, %s99
    %p103 = pneg %p97
    %p104 = scmp.eq.s32.totalorder %s13, 1
    %p105 = por %p103, %p104
    %p106 = scmp.ne.s32.totalorder %s98, %s101
    %p107 = scmp.eq.s32.totalorder %s13, 0
    %p108 = por %p106, %p107
    %p109 = scmp.ne.s32.totalorder %s98, %s101
    %p110 = scmp.eq.s32.totalorder %s18, 1
    %p111 = por %p109, %p110
    %p112 = scmp.ne.s32.totalorder %s101, %s102
    %p113 = scmp.eq.s32.totalorder %s18, 0
    %p114 = por %p112, %p113
    %p115 = scmp.ne.s32.totalorder %s101, %s102
    %p116 = scmp.eq.s32.totalorder %s19, 1
    %p117 = por %p115, %p116
    %p119 = scmp.ne.s32.totalorder %s102, %s118
    %p120 = scmp.eq.s32.totalorder %s19, 0
    %p121 = por %p119, %p120
    %s122 = ssub.s32 %s20, %s39
    %p123 = scmp.eq.s32.totalorder %s122, 0
    %s125 = sadd.s32 %s124, 1
    %s126 = scalar_select %p123, %s124, %s125
    %p129 = pneg %p123
    %p130 = scmp.eq.s32.totalorder %s13, 1
    %p131 = por %p129, %p130
    %p132 = scmp.ne.s32.totalorder %s124, %s127
    %p133 = scmp.eq.s32.totalorder %s13, 0
    %p134 = por %p132, %p133
    %p135 = scmp.ne.s32.totalorder %s124, %s127
    %p136 = scmp.eq.s32.totalorder %s18, 1
    %p137 = por %p135, %p136
    %p138 = scmp.ne.s32.totalorder %s127, %s128
    %p139 = scmp.eq.s32.totalorder %s18, 0
    %p140 = por %p138, %p139
    %p141 = scmp.ne.s32.totalorder %s127, %s128
    %p142 = scmp.eq.s32.totalorder %s19, 1
    %p143 = por %p141, %p142
    %p145 = scmp.ne.s32.totalorder %s128, %s144
    %p146 = scmp.eq.s32.totalorder %s19, 0
    %p147 = por %p145, %p146
    %s148 = ssub.s32 %s20, %s39
    %p149 = scmp.eq.s32.totalorder %s148, 0
    %s151 = sadd.s32 %s150, 1
    %s152 = scalar_select %p149, %s150, %s151
    %p155 = pneg %p149
    %p156 = scmp.eq.s32.totalorder %s13, 1
    %p157 = por %p155, %p156
    %p158 = scmp.ne.s32.totalorder %s150, %s153
    %p159 = scmp.eq.s32.totalorder %s13, 0
    %p160 = por %p158, %p159
    %p161 = scmp.ne.s32.totalorder %s150, %s153
    %p162 = scmp.eq.s32.totalorder %s18, 1
    %p163 = por %p161, %p162
    %p164 = scmp.ne.s32.totalorder %s153, %s154
    %p165 = scmp.eq.s32.totalorder %s18, 0
    %p166 = por %p164, %p165
    %p167 = scmp.ne.s32.totalorder %s153, %s154
    %p168 = scmp.eq.s32.totalorder %s19, 1
    %p169 = por %p167, %p168
    %p171 = scmp.ne.s32.totalorder %s154, %s170
    %p172 = scmp.eq.s32.totalorder %s19, 0
    %p173 = por %p171, %p172
    %s174 = ssub.s32 %s20, %s39
    %p175 = scmp.eq.s32.totalorder %s174, 0
    %s177 = sadd.s32 %s176, 1
    %s178 = scalar_select %p175, %s176, %s177
    %p181 = pneg %p175
    %p182 = scmp.eq.s32.totalorder %s13, 1
    %p183 = por %p181, %p182
    %p184 = scmp.ne.s32.totalorder %s176, %s179
    %p185 = scmp.eq.s32.totalorder %s13, 0
    %p186 = por %p184, %p185
    %p187 = scmp.ne.s32.totalorder %s176, %s179
    %p188 = scmp.eq.s32.totalorder %s18, 1
    %p189 = por %p187, %p188
    %p190 = scmp.ne.s32.totalorder %s179, %s180
    %p191 = scmp.eq.s32.totalorder %s18, 0
    %p192 = por %p190, %p191
    %p193 = scmp.ne.s32.totalorder %s179, %s180
    %p194 = scmp.eq.s32.totalorder %s19, 1
    %p195 = por %p193, %p194
    %p197 = scmp.ne.s32.totalorder %s180, %s196
    %p198 = scmp.eq.s32.totalorder %s19, 0
    %p199 = por %p197, %p198
    %s200 = ssub.s32 %s20, %s39
    %p201 = scmp.eq.s32.totalorder %s200, 0
    %s203 = sadd.s32 %s202, 1
    %s204 = scalar_select %p201, %s202, %s203
    %p207 = pneg %p201
    %p208 = scmp.eq.s32.totalorder %s13, 1
    %p209 = por %p207, %p208
    %p210 = scmp.ne.s32.totalorder %s202, %s205
    %p211 = scmp.eq.s32.totalorder %s13, 0
    %p212 = por %p210, %p211
    %p213 = scmp.ne.s32.totalorder %s202, %s205
    %p214 = scmp.eq.s32.totalorder %s18, 1
    %p215 = por %p213, %p214
    %p216 = scmp.ne.s32.totalorder %s205, %s206
    %p217 = scmp.eq.s32.totalorder %s18, 0
    %p218 = por %p216, %p217
    %p219 = scmp.ne.s32.totalorder %s205, %s206
    %p220 = scmp.eq.s32.totalorder %s19, 1
    %p221 = por %p219, %p220
    %p223 = scmp.ne.s32.totalorder %s206, %s222
    %p224 = scmp.eq.s32.totalorder %s19, 0
    %p225 = por %p223, %p224
    %p226 = scmp.le.s32.totalorder 1, %s13
    %p227 = scmp.lt.s32.totalorder %s13, 3
    %p228 = pnand %p226, %p227
    %p229 = pneg %p228
    // Predicated region
    $region9: #{batchnorm2d_forward.2} parent=5 // pred_check
      _
    $region10: #{batchnorm2d_forward.2} parent=5 // pred_check_branch
      %231 = sbr.rel (%p228) target = $region12
    $region11: #{batchnorm2d_forward.2} parent=5 // pred_region
      %s232 = ssub.s32 %s13, 1
      // Predicated region
      $region13: #{batchnorm2d_forward.2} parent=11 // pred_check
        %p233 = pneg %p58
      $region14: #{batchnorm2d_forward.2} parent=11 // pred_check_branch
        %235 = sbr.rel (%p233) target = $region16
      $region15: #{batchnorm2d_forward.2} parent=11 // pred_region
        %p236 = scmp.lt.s32.totalorder %s23, 0
        %s237 = scalar_select %p236, %s23, 0
        %s238 = smul.addr %s237, 4
        %s239 = scalar_lea.vmem %s0, %s238
      $region16: #{batchnorm2d_forward.2} parent=11 // pred_fallthru
        _
      // Predicated region
      $region17: #{batchnorm2d_forward.2} parent=11 // pred_check
        %p240 = pneg %p84
      $region18: #{batchnorm2d_forward.2} parent=11 // pred_check_branch
        %242 = sbr.rel (%p240) target = $region20
      $region19: #{batchnorm2d_forward.2} parent=11 // pred_region
        %p243 = scmp.lt.s32.totalorder %s23, 0
        %s244 = scalar_select %p243, %s23, 0
        %s245 = smul.addr %s244, 4
        %s246 = scalar_lea.vmem %s1, %s245
      $region20: #{batchnorm2d_forward.2} parent=11 // pred_fallthru
        _
    $region12: #{batchnorm2d_forward.2} parent=5 // pred_fallthru
      _
    %p247 = scmp.lt.s32.totalorder %s13, 2
    // Predicated region
    $region21: #{batchnorm2d_forward.2} parent=5 // pred_check
      %p248 = pneg %p247
    $region22: #{batchnorm2d_forward.2} parent=5 // pred_check_branch
      %250 = sbr.rel (%p248) target = $region24
    $region23: #{batchnorm2d_forward.2} parent=5 // pred_region
      // Predicated region
      $region25: #{batchnorm2d_forward.2} parent=23 // pred_check
        %p251 = pneg %p108
      $region26: #{batchnorm2d_forward.2} parent=23 // pred_check_branch
        %253 = sbr.rel (%p251) target = $region28
      $region27: #{batchnorm2d_forward.2} parent=23 // pred_region
        %s254 = smul.u32 2, %s22
        %p255 = scmp.lt.s32.totalorder %s21, 1
        %s256 = scalar_select %p255, %s21, 1
        %p257 = scmp.lt.s32.totalorder %s20, 0
        %s258 = scalar_select %p257, %s20, 0
        %p259 = scmp.lt.s32.totalorder %s254, 1
        %s260 = scalar_select %p259, %s254, 1
        %s261 = smul.addr %s258, 2
        %s262 = sadd.s32 %s260, %s261
        %s263 = smul.addr %s256, 2
        %s264 = sadd.s32 %s262, %s263
        %s265 = smul.addr %s264, 4
        %s266 = scalar_lea.vmem %s2, %s265
        %s267 = smul.u32 2, %s22
      $region28: #{batchnorm2d_forward.2} parent=23 // pred_fallthru
        _
    $region24: #{batchnorm2d_forward.2} parent=5 // pred_fallthru
      _
    %p268 = scmp.le.s32.totalorder 1, %s13
    %p269 = scmp.lt.s32.totalorder %s13, 3
    %p270 = pnand %p268, %p269
    %p271 = pneg %p270
    // Predicated region
    $region29: #{batchnorm2d_forward.2} parent=5 // pred_check
      _
    $region30: #{batchnorm2d_forward.2} parent=5 // pred_check_branch
      %273 = sbr.rel (%p270) target = $region32
    $region31: #{batchnorm2d_forward.2} parent=5 // pred_region
      %s274 = ssub.s32 %s13, 1
      %p275 = scmp.lt.s32.totalorder %s23, 0
      %s276 = scalar_select %p275, %s23, 0
      %s277 = smul.addr %s276, 4
      %s278 = scalar_lea.vmem %s0, %s277
      %p279 = pneg %p58
      %p280 = pneg %p55
      %p281 = scmp.lt.s32.totalorder %s23, 0
      %s282 = scalar_select %p281, %s23, 0
      %s283 = smul.addr %s282, 4
      %s284 = scalar_lea.vmem %s1, %s283
      %p285 = pneg %p84
      %p286 = pneg %p81
      %s287 = smul.u32 2, %s25
      %p288 = scmp.lt.s32.totalorder %s24, 1
      %s289 = scalar_select %p288, %s24, 1
      %p290 = scmp.lt.s32.totalorder %s23, 0
      %s291 = scalar_select %p290, %s23, 0
      %p292 = scmp.lt.s32.totalorder %s287, 1
      %s293 = scalar_select %p292, %s287, 1
      %s294 = smul.addr %s291, 2
      %s295 = sadd.s32 %s293, %s294
      %s296 = smul.addr %s289, 2
      %s297 = sadd.s32 %s295, %s296
      %s298 = smul.addr %s297, 4
      %s299 = scalar_lea.vmem %s2, %s298
      %p300 = pneg %p114
      %p301 = pneg %p111
      %p302 = pneg %p140
      %p303 = pneg %p137
      %p304 = scmp.lt.s32.totalorder %s23, 0
      %s305 = scalar_select %p304, %s23, 0
      %s306 = smul.addr %s305, 4
      %s307 = scalar_lea.vmem %s3, %s306
      %p308 = pneg %p166
      %p309 = pneg %p163
      %p310 = scmp.lt.s32.totalorder %s23, 0
      %s311 = scalar_select %p310, %s23, 0
      %s312 = smul.addr %s311, 4
      %s313 = scalar_lea.vmem %s4, %s312
      %p314 = pneg %p192
      %p315 = pneg %p189
      %p316 = scmp.lt.s32.totalorder %s23, 0
      %s317 = scalar_select %p316, %s23, 0
      %s318 = smul.addr %s317, 4
      %s319 = scalar_lea.vmem %s5, %s318
      %p320 = pneg %p218
      %p321 = pneg %p215
      %p322 = scmp.lt.s32.totalorder %s23, 0
      %s323 = scalar_select %p322, %s23, 0
      %s324 = smul.addr %s323, 4
      %s325 = scalar_lea.vmem %s6, %s324
      %p326 = scmp.lt.s32.totalorder %s23, 0
      %s327 = scalar_select %p326, %s23, 0
      %s328 = smul.addr %s327, 4
      %s329 = scalar_lea.vmem %s0, %s328
      %p330 = scmp.lt.s32.totalorder %s23, 0
      %s331 = scalar_select %p330, %s23, 0
      %s332 = smul.addr %s331, 4
      %s333 = scalar_lea.vmem %s1, %s332
      %s334 = smul.u32 2, %s25
      %p335 = scmp.lt.s32.totalorder %s24, 1
      %s336 = scalar_select %p335, %s24, 1
      %p337 = scmp.lt.s32.totalorder %s23, 0
      %s338 = scalar_select %p337, %s23, 0
      %p339 = scmp.lt.s32.totalorder %s334, 1
      %s340 = scalar_select %p339, %s334, 1
      %s341 = smul.addr %s338, 2
      %s342 = sadd.s32 %s340, %s341
      %s343 = smul.addr %s336, 2
      %s344 = sadd.s32 %s342, %s343
      %s345 = smul.addr %s344, 4
      %s346 = scalar_lea.vmem %s2, %s345
      %s347 = smul.u32 2, %s25
      %p348 = scmp.lt.s32.totalorder %s23, 0
      %s349 = scalar_select %p348, %s23, 0
      %s350 = smul.addr %s349, 4
      %s351 = scalar_lea.vmem %s3, %s350
      %p352 = scmp.lt.s32.totalorder %s23, 0
      %s353 = scalar_select %p352, %s23, 0
      %s354 = smul.addr %s353, 4
      %s355 = scalar_lea.vmem %s4, %s354
      %p356 = scmp.lt.s32.totalorder %s23, 0
      %s357 = scalar_select %p356, %s23, 0
      %s358 = smul.addr %s357, 4
      %s359 = scalar_lea.vmem %s5, %s358
      %p360 = scmp.lt.s32.totalorder %s23, 0
      %s361 = scalar_select %p360, %s23, 0
      %s362 = smul.addr %s361, 4
      %s363 = scalar_lea.vmem %s6, %s362
      %p364 = scmp.eq.s32.totalorder %s24, 0
      %p365 = scmp.eq.s32.totalorder %s25, 0
      %p366 = pnand %p364, %p365
      %p367 = pneg %p366
      // Predicated region
      $region33: #{batchnorm2d_forward.2} parent=31 // pred_check
        _
      $region34: #{batchnorm2d_forward.2} parent=31 // pred_check_branch
        %369 = sbr.rel (%p366) target = $region36
      $region35: #{batchnorm2d_forward.2} parent=31 // pred_region
        %vm370 = vcmask 3072
        %371 = vst.msk [vmem:[%s351] sm:$0xf] %vm370, 0.0
        %372 = vst.msk [vmem:[%s355] sm:$0xf] %vm370, 0.0
        %373 = vst.msk [vmem:[%s359] sm:$0xf] %vm370, 0.0
        %374 = vst.msk [vmem:[%s363] sm:$0xf] %vm370, 0.0
      $region36: #{batchnorm2d_forward.2} parent=31 // pred_fallthru
        _
      %v375 = vld [vmem:[%s346] sm:$0xff]
      %v376 = vld [vmem:[%s351] sm:$0xf]
      %378 = vst [vmem:[#allocation1] ss:$2 sm:$0xff] %v375
      %v379 = vld.sshfl [vmem:[#allocation1] sm:$0xff pattern:$0x75316420]
      %v380 = vld.sshfl [vmem:[#allocation1 + $0x8] sm:$0xff pattern:$0x75316420]
      %vm383 = vcmask 1043456
      %v384 = vsel %vm383, %v379, 0.0
      %v385 = vsel %vm383, %v380, 0.0
      %v386 = vadd.f32 %v384, %v385
      %387 = vadd.xlane.f32.xlu0 %v386
      %v388 = vpop.xlane.xlu0 %387
      %v389 = vadd.f32 %v376, %v388
      %vm390 = vcmask 3072
      %391 = vst.msk [vmem:[%s351] sm:$0xf] %vm390, %v389
      %v392 = vld [vmem:[%s355] sm:$0xf]
      %v393 = vmul.f32 %v375, %v375
      %395 = vst [vmem:[#allocation1] ss:$2 sm:$0xff] %v393
      %v396 = vld.sshfl [vmem:[#allocation1] sm:$0xff pattern:$0x75316420]
      %v397 = vld.sshfl [vmem:[#allocation1 + $0x8] sm:$0xff pattern:$0x75316420]
      %v400 = vsel %vm383, %v396, 0.0
      %v401 = vsel %vm383, %v397, 0.0
      %v402 = vadd.f32 %v400, %v401
      %403 = vadd.xlane.f32.xlu0 %v402
      %v404 = vpop.xlane.xlu0 %403
      %v405 = vadd.f32 %v392, %v404
      %406 = vst.msk [vmem:[%s355] sm:$0xf] %vm390, %v405
      %p407 = scmp.eq.s32.totalorder %s24, 1
      %p408 = pnand %p407, %p365
      %p409 = pneg %p408
      // Predicated region
      $region37: #{batchnorm2d_forward.2} parent=31 // pred_check
        _
      $region38: #{batchnorm2d_forward.2} parent=31 // pred_check_branch
        %411 = sbr.rel (%p408) target = $region40
      $region39: #{batchnorm2d_forward.2} parent=31 // pred_region
        %v412 = vld [vmem:[%s351] sm:$0xf]
        %v413 = vmul.f32 %v412, 0.001953125
        %v414 = vld [vmem:[%s355] sm:$0xf]
        %v415 = vmul.f32 %v414, 0.001953125
        %v416 = vmul.f32 %v413, %v413
        %v417 = vsub.f32 %v415, %v416
        %v418 = vmax.f32 %v417, 0.0
        %v419 = vadd.f32 %v418, 1e-05
        %v420 = vrsqrt.pop %v419
        %v421 = vmul.f32 %v420, %v419
        %v422 = vmul.f32 %v421, %v420
        %v423 = vmul.f32 0.5, %v422
        %v424 = vsub.f32 1.5, %v423
        %v425 = vmul.f32 %v420, %v424
        %vm426 = vweird.f32 %v419
        %vm427 = vweird.f32 %v420
        %vm428 = vmor %vm426, %vm427
        %v429 = vsel %vm428, %v420, %v425
        %v430 = vld [vmem:[%s329] sm:$0xf]
        %v431 = vmul.f32 %v430, %v429
        %432 = vst.msk [vmem:[%s351] sm:$0xf] %vm390, %v413
        %433 = vst.msk [vmem:[%s355] sm:$0xf] %vm390, %v418
        %434 = vst.msk [vmem:[%s359] sm:$0xf] %vm390, %v431
        %v435 = vld [vmem:[%s333] sm:$0xf]
        %v436 = vmul.f32 %v413, %v431
        %v437 = vsub.f32 %v435, %v436
        %438 = vst.msk [vmem:[%s363] sm:$0xf] %vm390, %v437
      $region40: #{batchnorm2d_forward.2} parent=31 // pred_fallthru
        _
      %p439 = scmp.lt.s32.totalorder %s23, 0
      %s440 = scalar_select %p439, %s23, 0
      %s441 = smul.addr %s440, 4
      %s442 = scalar_lea.vmem %s3, %s441
      %p443 = scmp.lt.s32.totalorder %s23, 0
      %s444 = scalar_select %p443, %s23, 0
      %s445 = smul.addr %s444, 4
      %s446 = scalar_lea.vmem %s4, %s445
      %p447 = scmp.lt.s32.totalorder %s23, 0
      %s448 = scalar_select %p447, %s23, 0
      %s449 = smul.addr %s448, 4
      %s450 = scalar_lea.vmem %s5, %s449
      %p451 = scmp.lt.s32.totalorder %s23, 0
      %s452 = scalar_select %p451, %s23, 0
      %s453 = smul.addr %s452, 4
      %s454 = scalar_lea.vmem %s6, %s453
      // Predicated region
      $region41: #{batchnorm2d_forward.2} parent=31 // pred_check
        %p455 = pneg %p137
      $region42: #{batchnorm2d_forward.2} parent=31 // pred_check_branch
        %457 = sbr.rel (%p455) target = $region44
      $region43: #{batchnorm2d_forward.2} parent=31 // pred_region
        _
      $region44: #{batchnorm2d_forward.2} parent=31 // pred_fallthru
        _
      // Predicated region
      $region45: #{batchnorm2d_forward.2} parent=31 // pred_check
        %p458 = pneg %p163
      $region46: #{batchnorm2d_forward.2} parent=31 // pred_check_branch
        %460 = sbr.rel (%p458) target = $region48
      $region47: #{batchnorm2d_forward.2} parent=31 // pred_region
        _
      $region48: #{batchnorm2d_forward.2} parent=31 // pred_fallthru
        _
      // Predicated region
      $region49: #{batchnorm2d_forward.2} parent=31 // pred_check
        %p461 = pneg %p189
      $region50: #{batchnorm2d_forward.2} parent=31 // pred_check_branch
        %463 = sbr.rel (%p461) target = $region52
      $region51: #{batchnorm2d_forward.2} parent=31 // pred_region
        _
      $region52: #{batchnorm2d_forward.2} parent=31 // pred_fallthru
        _
      // Predicated region
      $region53: #{batchnorm2d_forward.2} parent=31 // pred_check
        %p464 = pneg %p215
      $region54: #{batchnorm2d_forward.2} parent=31 // pred_check_branch
        %466 = sbr.rel (%p464) target = $region56
      $region55: #{batchnorm2d_forward.2} parent=31 // pred_region
        _
      $region56: #{batchnorm2d_forward.2} parent=31 // pred_fallthru
        _
      // Predicated region
      $region57: #{batchnorm2d_forward.2} parent=31 // pred_check
        %p467 = pneg %p137
      $region58: #{batchnorm2d_forward.2} parent=31 // pred_check_branch
        %469 = sbr.rel (%p467) target = $region60
      $region59: #{batchnorm2d_forward.2} parent=31 // pred_region
        %p470 = scmp.lt.s32.totalorder %s23, 0
        %s471 = scalar_select %p470, %s23, 0
        %s472 = smul.addr %s471, 4
        %s473 = scalar_lea.vmem %s3, %s472
      $region60: #{batchnorm2d_forward.2} parent=31 // pred_fallthru
        _
      // Predicated region
      $region61: #{batchnorm2d_forward.2} parent=31 // pred_check
        %p474 = pneg %p163
      $region62: #{batchnorm2d_forward.2} parent=31 // pred_check_branch
        %476 = sbr.rel (%p474) target = $region64
      $region63: #{batchnorm2d_forward.2} parent=31 // pred_region
        %p477 = scmp.lt.s32.totalorder %s23, 0
        %s478 = scalar_select %p477, %s23, 0
        %s479 = smul.addr %s478, 4
        %s480 = scalar_lea.vmem %s4, %s479
      $region64: #{batchnorm2d_forward.2} parent=31 // pred_fallthru
        _
      // Predicated region
      $region65: #{batchnorm2d_forward.2} parent=31 // pred_check
        %p481 = pneg %p189
      $region66: #{batchnorm2d_forward.2} parent=31 // pred_check_branch
        %483 = sbr.rel (%p481) target = $region68
      $region67: #{batchnorm2d_forward.2} parent=31 // pred_region
        %p484 = scmp.lt.s32.totalorder %s23, 0
        %s485 = scalar_select %p484, %s23, 0
        %s486 = smul.addr %s485, 4
        %s487 = scalar_lea.vmem %s5, %s486
      $region68: #{batchnorm2d_forward.2} parent=31 // pred_fallthru
        _
      // Predicated region
      $region69: #{batchnorm2d_forward.2} parent=31 // pred_check
        %p488 = pneg %p215
      $region70: #{batchnorm2d_forward.2} parent=31 // pred_check_branch
        %490 = sbr.rel (%p488) target = $region72
      $region71: #{batchnorm2d_forward.2} parent=31 // pred_region
        %p491 = scmp.lt.s32.totalorder %s23, 0
        %s492 = scalar_select %p491, %s23, 0
        %s493 = smul.addr %s492, 4
        %s494 = scalar_lea.vmem %s6, %s493
      $region72: #{batchnorm2d_forward.2} parent=31 // pred_fallthru
        _
    $region32: #{batchnorm2d_forward.2} parent=5 // pred_fallthru
      _
    %p495 = scmp.le.s32.totalorder 2, %s13
    // Predicated region
    $region73: #{batchnorm2d_forward.2} parent=5 // pred_check
      %p496 = pneg %p495
    $region74: #{batchnorm2d_forward.2} parent=5 // pred_check_branch
      %498 = sbr.rel (%p496) target = $region76
    $region75: #{batchnorm2d_forward.2} parent=5 // pred_region
      %s499 = ssub.s32 %s13, 2
    $region76: #{batchnorm2d_forward.2} parent=5 // pred_fallthru
      _
  $region6: #{batchnorm2d_forward.2} parent=0 // loop_footer
    %s17 = sadd.s32 1, %s13
  $region7: #{batchnorm2d_forward.2} parent=0 // loop_footer_branch
    %12 = sbr.rel target = $region3
  $region8: #{batchnorm2d_forward.2} parent=0 // loop_exit
    _

</llo_original>
